<compile_context>
chip_gen: v5e
topology: v5e:2x2
jax: 0.10.0
libtpu: 0.0.40
codegen_flags: <defaults>
</compile_context>

<pallas_src>
import jax
import jax.numpy as jnp
from jax.experimental import pallas as pl
from jax.experimental.pallas import tpu as pltpu


def _round_up(a, b):
    return -(-a // b) * b


def _cdiv(a, b):
    return -(-a // b)


def _tile_padded_bytes(shape, dtype):
    """VMEM footprint estimate: last two dims padded to the (sublane, 128) tile."""
    bpe = jnp.dtype(dtype).itemsize
    sub = max(8, 32 // bpe)                  # 8 for f32, 16 for bf16
    dims = list(shape)
    dims[-1] = _round_up(dims[-1], 128)
    if len(dims) >= 2:
        dims[-2] = _round_up(dims[-2], sub)
    n = 1
    for d in dims:
        n *= d
    return n * bpe


def _patch_embed_kernel(p_ref, w_ref, b_ref, o_ref):
    """One grid step = one MXU matmul over the fully folded contraction.

    p_ref: [T_M, Kc]   im2col patch tile (Kc = K*K*C)
    w_ref: [Kc, T_N]   folded conv weight tile
    b_ref: [1, T_N]    f32 bias tile
    o_ref: [T_M, T_N]  output tile
    """
    acc = jnp.dot(p_ref[...], w_ref[...], preferred_element_type=jnp.float32)
    o_ref[...] = (acc + b_ref[...]).astype(o_ref.dtype)


def patch_embed_forward(x_nchw, weight, bias, kernel_size=7, stride=4, padding=3,
                        compute_dtype=jnp.bfloat16, out_dtype=None,
                        target_m_rows=2048, target_n_cols=1024):
    """PatchEmbed.forward.

    x_nchw: [B, C, H, W]          (PyTorch NCHW input)
    weight: [planes, C, kh, kw]   (PyTorch Conv2d weight layout)
    bias:   [planes]
    returns [B, Ho, Wo, planes]   (conv output permuted 0,2,3,1)
    """
    B, C, H, W = x_nchw.shape
    planes = weight.shape[0]
    K, S, P = kernel_size, stride, padding
    Ho = (H + 2 * P - K) // S + 1
    Wo = (W + 2 * P - K) // S + 1
    if out_dtype is None:
        out_dtype = x_nchw.dtype

    Kc = K * K * C                                   # folded contraction
    Np = planes if planes % 128 == 0 else _round_up(planes, 128)

    # ---- glue (layout plumbing only): NHWC pad + im2col patch matrix --------
    # ~3x the (small) input; far smaller than the [B,Ho,Wo,planes] output.
    x = jnp.transpose(x_nchw, (0, 2, 3, 1)).astype(compute_dtype)   # NHWC
    x = jnp.pad(x, ((0, 0), (P, P), (P, P), (0, 0)))
    taps = []
    for kh in range(K):
        for kw in range(K):
            taps.append(x[:, kh:kh + S * (Ho - 1) + 1:S,
                            kw:kw + S * (Wo - 1) + 1:S, :])          # [B,Ho,Wo,C]
    patches = jnp.concatenate(taps, axis=-1).reshape(B * Ho * Wo, Kc)

    # weight [planes, C, kh, kw] -> [(kh*K+kw)*C + c, Np] (matches tap order)
    w_r = jnp.transpose(weight, (2, 3, 1, 0)).reshape(Kc, planes)
    w_r = jnp.pad(w_r, ((0, 0), (0, Np - planes))).astype(compute_dtype)
    b_r = jnp.pad(bias, (0, Np - planes)).reshape(1, Np).astype(jnp.float32)

    # ---- tiling: ragged-robust M tiles, lane-dense N tiles -------------------
    M = B * Ho * Wo
    nb_m = max(1, _cdiv(M, target_m_rows))
    T_M = _round_up(_cdiv(M, nb_m), 8)               # multiple of 8 sublanes
    M_pad = nb_m * T_M
    if M_pad > M:
        patches = jnp.pad(patches, ((0, M_pad - M), (0, 0)))

    T_N = Np
    if Np > target_n_cols:
        for cand in range(target_n_cols, 0, -128):   # Np % 128 == 0 here
            if Np % cand == 0:
                T_N = cand
                break
    nb_n = Np // T_N

    # ---- explicit VMEM budget (double-buffered blocks) ------------------------
    vmem_est = (2 * _tile_padded_bytes((T_M, Kc), compute_dtype)
                + 2 * _tile_padded_bytes((Kc, T_N), compute_dtype)
                + 2 * _tile_padded_bytes((1, T_N), jnp.float32)
                + 2 * _tile_padded_bytes((T_M, T_N), out_dtype)
                + (4 << 20))                          # slack for f32 acc / misc
    vmem_limit = int(min(max(vmem_est, 16 * 2**20), 64 * 2**20))

    out = pl.pallas_call(
        _patch_embed_kernel,
        out_shape=jax.ShapeDtypeStruct((M_pad, Np), out_dtype),
        grid_spec=pltpu.PrefetchScalarGridSpec(
            num_scalar_prefetch=0,
            grid=(nb_m, nb_n),
            in_specs=[
                pl.BlockSpec((T_M, Kc), lambda i, j: (i, 0)),
                pl.BlockSpec((Kc, T_N), lambda i, j: (0, j)),
                pl.BlockSpec((1, T_N), lambda i, j: (0, j)),
            ],
            out_specs=pl.BlockSpec((T_M, T_N), lambda i, j: (i, j)),
        ),
        compiler_params=pltpu.CompilerParams(
            dimension_semantics=("parallel", "parallel"),
            vmem_limit_bytes=vmem_limit),
    )(patches, w_r, b_r)

    out = out[:M].reshape(B, Ho, Wo, Np)
    if Np != planes:
        # TODO(synk): for planes not multiple of 128 this slice is an extra HBM
        # pass; real model uses planes=768 (no padding, no slice).
        out = out[..., :planes]
    return out


if __name__ == "__main__":
    # Small shapes consistent with the module's forward.
    B, C, H, W = 2, 4, 16, 16
    planes, K, S, P = 32, 7, 4, 3

    key = jax.random.PRNGKey(0)
    kx, kw_, kb = jax.random.split(key, 3)
    x = jax.random.normal(kx, (B, C, H, W), dtype=jnp.float32)
    weight = jax.random.normal(kw_, (planes, C, K, K), dtype=jnp.float32) * 0.05
    bias = jax.random.normal(kb, (planes,), dtype=jnp.float32) * 0.05

    # Reference: XLA conv (NCHW) + bias, then permute to NHWC.
    ref = jax.lax.conv_general_dilated(
        x, weight, window_strides=(S, S),
        padding=[(P, P), (P, P)],
        dimension_numbers=("NCHW", "OIHW", "NCHW"),
        precision=jax.lax.Precision.HIGHEST)
    ref = jnp.transpose(ref + bias[None, :, None, None], (0, 2, 3, 1))

    # f32 compute path: strict check.
    out_f32 = jax.block_until_ready(
        patch_embed_forward(x, weight, bias, K, S, P, compute_dtype=jnp.float32))
    assert out_f32.shape == ref.shape, (out_f32.shape, ref.shape)
    assert jnp.allclose(out_f32, ref, atol=5e-4, rtol=5e-4), "f32 path mismatch"

    # bf16 streamed path (default): loose check (bf16 operand quantization).
    out_bf16 = jax.block_until_ready(patch_embed_forward(x, weight, bias, K, S, P))
    assert out_bf16.shape == ref.shape, (out_bf16.shape, ref.shape)
    assert jnp.allclose(out_bf16, ref, atol=3e-2, rtol=3e-2), "bf16 path mismatch"

    print("KERNEL_OK")
</pallas_src>

<mosaic_0001>
module attributes {stable_mosaic.version = 11 : i64} {
  func.func @_patch_embed_kernel(%arg0: i32, %arg1: i32, %arg2: memref<32x196xf32, #tpu.memory_space<vmem>>, %arg3: memref<196x128xf32, #tpu.memory_space<vmem>>, %arg4: memref<1x128xf32, #tpu.memory_space<vmem>>, %arg5: memref<32x128xf32, #tpu.memory_space<vmem>>) attributes {dimension_semantics = [#tpu.dimension_semantics<parallel>, #tpu.dimension_semantics<parallel>], iteration_bounds = array<i64: 1, 1>, scalar_prefetch = 0 : i64, scratch_operands = 0 : i64, tpu.core_type = #tpu.core_type<tc>, window_params = [{transform_indices = @transform_0, window_bounds = array<i64: 32, 196>}, {transform_indices = @transform_1, window_bounds = array<i64: 196, 128>}, {transform_indices = @transform_2, window_bounds = array<i64: 1, 128>}, {transform_indices = @transform_3, window_bounds = array<i64: 32, 128>}]} {
    %c0 = arith.constant 0 : index
    %c0_0 = arith.constant 0 : index
    %0 = vector.load %arg2[%c0, %c0_0] : memref<32x196xf32, #tpu.memory_space<vmem>>, vector<32x196xf32>
    %c0_1 = arith.constant 0 : index
    %c0_2 = arith.constant 0 : index
    %1 = vector.load %arg3[%c0_1, %c0_2] : memref<196x128xf32, #tpu.memory_space<vmem>>, vector<196x128xf32>
    %cst = arith.constant dense<0.000000e+00> : vector<32x128xf32>
    %2 = tpu.matmul %0, %1, %cst {dimension_numbers = #tpu.dot_dimension_numbers<[1], [0], [0], [1], [0, 0, 1, 1], [], []>} : vector<32x196xf32>, vector<196x128xf32>, vector<32x128xf32> -> vector<32x128xf32>
    %c0_3 = arith.constant 0 : index
    %c0_4 = arith.constant 0 : index
    %3 = vector.load %arg4[%c0_3, %c0_4] : memref<1x128xf32, #tpu.memory_space<vmem>>, vector<1x128xf32>
    %4 = vector.broadcast %3 : vector<1x128xf32> to vector<32x128xf32>
    %5 = arith.addf %2, %4 : vector<32x128xf32>
    %c0_5 = arith.constant 0 : index
    %c0_6 = arith.constant 0 : index
    %6 = vector.load %arg5[%c0_5, %c0_6] : memref<32x128xf32, #tpu.memory_space<vmem>>, vector<32x128xf32>
    tpu.vector_store %arg5[%c0_5, %c0_6], %5 {strides = array<i32>} : memref<32x128xf32, #tpu.memory_space<vmem>>, vector<32x128xf32>,
    return
  }
  func.func @transform_0(%arg0: i32, %arg1: i32) -> (i32, i32) {
    %c0_i32 = arith.constant 0 : i32
    %c0_i32_0 = arith.constant 0 : i32
    return %arg0, %c0_i32 : i32, i32
  }
  func.func @transform_1(%arg0: i32, %arg1: i32) -> (i32, i32) {
    %c0_i32 = arith.constant 0 : i32
    %c0_i32_0 = arith.constant 0 : i32
    return %c0_i32, %arg1 : i32, i32
  }
  func.func @transform_2(%arg0: i32, %arg1: i32) -> (i32, i32) {
    %c0_i32 = arith.constant 0 : i32
    %c0_i32_0 = arith.constant 0 : i32
    return %c0_i32, %arg1 : i32, i32
  }
  func.func @transform_3(%arg0: i32, %arg1: i32) -> (i32, i32) {
    %c0_i32 = arith.constant 0 : i32
    return %arg0, %arg1 : i32, i32
  }
}

</mosaic_0001>

<llo_original>
// kernel: tpu_custom_call.1
$region0: #{tpu_custom_call.1}
  #allocation0 [shape = 'u32[]', space=smem, size = 0x4, offset = 0x4, fixed_abs, tag = 'smem constant byte address 0x4 - core index']
  #allocation1 [shape = 'u32[72,128]{1,0:T(1,128)}', space=vmem, size = 0x9000, scoped, tag = 'internal scratch']
  %s0 = inlined_call_operand.hbm [shape: f32[32,196], index: 0, kind: input, shape index: {}]
  %s1 = inlined_call_operand.hbm [shape: f32[196,128], index: 1, kind: input, shape index: {}]
  %s2 = inlined_call_operand.vmem [shape: f32[1,128], index: 2, kind: input, shape index: {}]
  %s3 = inlined_call_operand.hbm [shape: f32[32,128], index: 3, kind: output, shape index: {}]
  %s4 = sld [smem:[#allocation0]]
  $region30: #{tpu_custom_call.1} parent=0
    _
  %s6 = ssub.s32 1, %s4
  %s7 = scalar_select 0, %s6, %s4
  $region1: #{tpu_custom_call.1} parent=0
    #allocation2 [shape = 'u8[32768]{0}', space=vmem, size = 0x8000, scoped, tag = 'input window, operand 0, single buffered']
    #allocation3 [shape = 's32[1]{0}', space=sflag, size = 0x4, scoped, tag = 'scoped memory for tpu_custom_call.1']
    #allocation4 [shape = 's32[1]{0}', space=sflag, size = 0x4, scoped, tag = 'scoped memory for tpu_custom_call.1']
    #allocation5 [shape = 'u8[102400]{0}', space=vmem, size = 0x19000, scoped, tag = 'input window, operand 1, single buffered']
    #allocation6 [shape = 's32[1]{0}', space=sflag, size = 0x4, scoped, tag = 'scoped memory for tpu_custom_call.1']
    #allocation7 [shape = 'u8[16384]{0}', space=vmem, size = 0x4000, scoped, tag = 'output window, operand 0, single buffered']
    %8 = vsyncpa [#allocation3], 0
    %9 = vsyncpa [#allocation6], 0
    %10 = vsyncpa [#allocation4], 0
    // Predicated region
    $region2: #{tpu_custom_call.1} parent=1 // pred_check
      _
    $region3: #{tpu_custom_call.1} parent=1 // pred_check_branch
      %12 = sbr.rel (0) target = $region5
    $region4: #{tpu_custom_call.1} parent=1 // pred_region
      %14 = vsyncadd [#allocation3], 0
      %s15 = sshll.u32 %s0, 4
      %s16 = int_to_ptr.hbm [resolvable:$true] %s15
      %s17 = sshll.u32 [#allocation2], 4
      %s18 = int_to_ptr.vmem [resolvable:$true] %s17
      %23 = dma.hbm_to_vmem [thread:$0]  %s16, 1024, %s18, [#allocation3], 256, 256, 16
    $region5: #{tpu_custom_call.1} parent=1 // pred_fallthru
      _
    // Predicated region
    $region6: #{tpu_custom_call.1} parent=1 // pred_check
      _
    $region7: #{tpu_custom_call.1} parent=1 // pred_check_branch
      %25 = sbr.rel (0) target = $region9
    $region8: #{tpu_custom_call.1} parent=1 // pred_region
      %27 = vsyncadd [#allocation6], 0
      %s28 = sshll.u32 %s1, 4
      %s29 = int_to_ptr.hbm [resolvable:$true] %s28
      %s30 = sshll.u32 [#allocation5], 4
      %s31 = int_to_ptr.vmem [resolvable:$true] %s30
      %36 = dma.hbm_to_vmem [thread:$0]  %s29, 3200, %s31, [#allocation6], 128, 128, 8
    $region9: #{tpu_custom_call.1} parent=1 // pred_fallthru
      _
    // Predicated region
    $region10: #{tpu_custom_call.1} parent=1 // pred_check
      _
    $region11: #{tpu_custom_call.1} parent=1 // pred_check_branch
      %38 = sbr.rel (0) target = $region13
    $region12: #{tpu_custom_call.1} parent=1 // pred_region
      _
    $region13: #{tpu_custom_call.1} parent=1 // pred_fallthru
      _
    // Predicated region
    $region14: #{tpu_custom_call.1} parent=1 // pred_check
      _
    $region15: #{tpu_custom_call.1} parent=1 // pred_check_branch
      %40 = sbr.rel (0) target = $region17
    $region16: #{tpu_custom_call.1} parent=1 // pred_region
      %42 = dma.done [#allocation3], 1024
    $region17: #{tpu_custom_call.1} parent=1 // pred_fallthru
      _
    // Predicated region
    $region18: #{tpu_custom_call.1} parent=1 // pred_check
      _
    $region19: #{tpu_custom_call.1} parent=1 // pred_check_branch
      %44 = sbr.rel (0) target = $region21
    $region20: #{tpu_custom_call.1} parent=1 // pred_region
      %46 = dma.done [#allocation6], 3200
    $region21: #{tpu_custom_call.1} parent=1 // pred_fallthru
      _
    %v47 = vld [vmem:[#allocation2] sm:$0xff]
    %v48 = vld [vmem:[#allocation2 + $0x8] sm:$0xff]
    %v49 = vld [vmem:[#allocation2 + $0x10] sm:$0xff]
    %v50 = vld [vmem:[#allocation2 + $0x18] sm:$0xff]
    %v51 = vld [vmem:[#allocation2 + $0x20] sm:$0xff]
    %v52 = vld [vmem:[#allocation2 + $0x28] sm:$0xff]
    %v53 = vld [vmem:[#allocation2 + $0x30] sm:$0xff]
    %v54 = vld [vmem:[#allocation2 + $0x38] sm:$0xff]
    %v55 = vld [vmem:[#allocation5] sm:$0xff]
    %v56 = vld [vmem:[#allocation5 + $0x8] sm:$0xff]
    %v57 = vld [vmem:[#allocation5 + $0x10] sm:$0xff]
    %v58 = vld [vmem:[#allocation5 + $0x18] sm:$0xff]
    %v59 = vld [vmem:[#allocation5 + $0x20] sm:$0xff]
    %v60 = vld [vmem:[#allocation5 + $0x28] sm:$0xff]
    %v61 = vld [vmem:[#allocation5 + $0x30] sm:$0xff]
    %v62 = vld [vmem:[#allocation5 + $0x38] sm:$0xff]
    %v63 = vld [vmem:[#allocation5 + $0x40] sm:$0xff]
    %v64 = vld [vmem:[#allocation5 + $0x48] sm:$0xff]
    %v65 = vld [vmem:[#allocation5 + $0x50] sm:$0xff]
    %v66 = vld [vmem:[#allocation5 + $0x58] sm:$0xff]
    %v67 = vld [vmem:[#allocation5 + $0x60] sm:$0xff]
    %v68 = vld [vmem:[#allocation5 + $0x68] sm:$0xff]
    %v69 = vld [vmem:[#allocation5 + $0x70] sm:$0xff]
    %v70 = vld [vmem:[#allocation5 + $0x78] sm:$0xff]
    %v71 = vld [vmem:[#allocation5 + $0x80] sm:$0xff]
    %v72 = vld [vmem:[#allocation5 + $0x88] sm:$0xff]
    %v73 = vld [vmem:[#allocation5 + $0x90] sm:$0xff]
    %v74 = vld [vmem:[#allocation5 + $0x98] sm:$0xff]
    %v75 = vld [vmem:[#allocation5 + $0xa0] sm:$0xff]
    %v76 = vld [vmem:[#allocation5 + $0xa8] sm:$0xff]
    %v77 = vld [vmem:[#allocation5 + $0xb0] sm:$0xff]
    %v78 = vld [vmem:[#allocation5 + $0xb8] sm:$0xff]
    %v79 = vld [vmem:[#allocation5 + $0xc0] sm:$0xf]
    %v80 = vld [vmem:[%s2] sm:$0x1]
    %v82 = vperm.slane %v80, 0
    %vm84 = vcmask 556032
    %v86 = vsel %vm84, %v48, 0
    %v89 = vsel %vm84, %v50, 0
    %v92 = vsel %vm84, %v52, 0
    %v95 = vsel %vm84, %v54, 0
    %vm97 = vcmask 1043456
    %v99 = vsel %vm97, %v79, 0
    %101 = vmatpush.msra.mxu0 %v70
    %102 = vmatpush.msra.mxu0 %v69
    %103 = vmatpush.msra.mxu0 %v68
    %104 = vmatpush.msra.mxu0 %v67
    %105 = vmatpush.msra.mxu0 %v66
    %106 = vmatpush.msra.mxu0 %v65
    %107 = vmatpush.msra.mxu0 %v64
    %108 = vmatpush.msra.mxu0 %v63
    %109 = vmatpush.msra.mxu0 %v62
    %110 = vmatpush.msra.mxu0 %v61
    %111 = vmatpush.msra.mxu0 %v60
    %112 = vmatpush.msra.mxu0 %v59
    %113 = vmatpush.msra.mxu0 %v58
    %114 = vmatpush.msra.mxu0 %v57
    %115 = vmatpush.msra.mxu0 %v56
    %116 = vmatpush.msra.mxu0 %v55
    %117 = vmatmul.f32.gmra.mxu0 %v47
    %v118 = vpop.f32.mrf.mxu0
    %v119 = vadd.f32 %v82, %v118
    %120 = vmatmul.f32.gmra.mxu0 %v49
    %v121 = vpop.f32.mrf.mxu0
    %v122 = vadd.f32 %v82, %v121
    %123 = vmatmul.f32.gmra.mxu0 %v51
    %v124 = vpop.f32.mrf.mxu0
    %v125 = vadd.f32 %v82, %v124
    %126 = vmatmul.f32.gmra.mxu0 %v53
    %v127 = vpop.f32.mrf.mxu0
    %v128 = vadd.f32 %v82, %v127
    %129 = vdwg.mxu0
    %130 = vmatpush.msra.mxu0 0.0
    %131 = vmatpush.msra.mxu0 0.0
    %132 = vmatpush.msra.mxu0 0.0
    %133 = vmatpush.msra.mxu0 0.0
    %134 = vmatpush.msra.mxu0 0.0
    %135 = vmatpush.msra.mxu0 0.0
    %136 = vmatpush.msra.mxu0 0.0
    %137 = vmatpush.msra.mxu0 %v99
    %138 = vmatpush.msra.mxu0 %v78
    %139 = vmatpush.msra.mxu0 %v77
    %140 = vmatpush.msra.mxu0 %v76
    %141 = vmatpush.msra.mxu0 %v75
    %142 = vmatpush.msra.mxu0 %v74
    %143 = vmatpush.msra.mxu0 %v73
    %144 = vmatpush.msra.mxu0 %v72
    %145 = vmatpush.msra.mxu0 %v71
    %146 = vmatmul.f32.gmra.mxu0 %v86
    %v147 = vpop.f32.mrf.mxu0
    %v148 = vadd.f32 %v119, %v147
    %149 = vmatmul.f32.gmra.mxu0 %v89
    %v150 = vpop.f32.mrf.mxu0
    %v151 = vadd.f32 %v122, %v150
    %152 = vmatmul.f32.gmra.mxu0 %v92
    %v153 = vpop.f32.mrf.mxu0
    %v154 = vadd.f32 %v125, %v153
    %155 = vmatmul.f32.gmra.mxu0 %v95
    %v156 = vpop.f32.mrf.mxu0
    %v157 = vadd.f32 %v128, %v156
    %158 = vdwg.mxu0
    %159 = vst [vmem:[#allocation7] sm:$0xff] %v148
    %160 = vst [vmem:[#allocation7 + $0x8] sm:$0xff] %v151
    %161 = vst [vmem:[#allocation7 + $0x10] sm:$0xff] %v154
    %162 = vst [vmem:[#allocation7 + $0x18] sm:$0xff] %v157
    // Predicated region
    $region22: #{tpu_custom_call.1} parent=1 // pred_check
      _
    $region23: #{tpu_custom_call.1} parent=1 // pred_check_branch
      %164 = sbr.rel (0) target = $region25
    $region24: #{tpu_custom_call.1} parent=1 // pred_region
      %166 = vsyncadd [#allocation4], 0
      %s167 = sshll.u32 [#allocation7], 4
      %s168 = int_to_ptr.vmem [resolvable:$true] %s167
      %s169 = sshll.u32 %s3, 4
      %s170 = int_to_ptr.hbm [resolvable:$true] %s169
      %175 = dma.vmem_to_hbm [thread:$0]  %s168, 512, %s170, [#allocation4], 128, 128, 8
    $region25: #{tpu_custom_call.1} parent=1 // pred_fallthru
      _
    // Predicated region
    $region26: #{tpu_custom_call.1} parent=1 // pred_check
      _
    $region27: #{tpu_custom_call.1} parent=1 // pred_check_branch
      %177 = sbr.rel (0) target = $region29
    $region28: #{tpu_custom_call.1} parent=1 // pred_region
      %179 = dma.done [#allocation4], 512
    $region29: #{tpu_custom_call.1} parent=1 // pred_fallthru
      _
    %180 = vsyncpa [#allocation3], 1
    %181 = vsyncpa [#allocation6], 1
    %182 = vsyncpa [#allocation4], 1

</llo_original>
